<compile_context>
chip_gen: v7x
topology: tpu7x:2x2x1
jax: 0.10.0
libtpu: 0.0.40
codegen_flags: <defaults>
</compile_context>

<pallas_src>
import functools

import jax
import jax.numpy as jnp
from jax.experimental import pallas as pl
from jax.experimental.pallas import tpu as pltpu

EPS = 1e-8
FORGET_RATE = 1.0 - 10.0 * EPS


def _feature_map(x):
    # torch: pow(elu(x) + 1, 5);  elu(x)+1 == where(x>0, x+1, exp(x))
    # exp lands on the EUP slot; the x^5 is 3 explicit VPU multiplies.
    y = jnp.where(x > 0, x + 1.0, jnp.exp(x))
    y2 = y * y
    y4 = y2 * y2
    return y4 * y


def linear_attention_kernel(q_ref, k_ref, v_ref, mem_ref, zeta_t_ref,
                            attn_ref, mem_out_ref, zeta_t_out_ref, *, mxu_dtype):
    # All refs are full (B, ...) tiles — a single grid step covers the batch.
    q = _feature_map(q_ref[...])                    # (B, T, C) f32
    k = _feature_map(k_ref[...])                    # (B, T, C) f32
    v = v_ref[...]                                  # (B, T, C) f32

    if mxu_dtype != jnp.float32:
        cast = lambda x: x.astype(mxu_dtype)        # bf16 MXU operands (v6e/v7x)
    else:
        cast = lambda x: x

    # delta_memory[b] = k[b]^T @ v[b]  — contraction over T, no explicit transpose.
    delta_memory = jnp.einsum('btc,btd->bcd', cast(k), cast(v),
                              preferred_element_type=jnp.float32)      # (B, C, C)

    memory = FORGET_RATE * mem_ref[...] + delta_memory                 # (B, C, C) f32
    # zeta carried transposed: zeta_t = zeta^T, so delta_zeta^T == k (pure VPU).
    zeta_t = FORGET_RATE * zeta_t_ref[...] + k                         # (B, T, C) f32

    # scale[b] = q[b] @ zeta[b] = q[b] @ zeta_t[b]^T   (trans_b-style contraction)
    scale = jnp.einsum('btc,bsc->bts', cast(q), cast(zeta_t),
                       preferred_element_type=jnp.float32) + EPS       # (B, T, T)
    score = jnp.einsum('btc,bcd->btd', cast(q), cast(memory),
                       preferred_element_type=jnp.float32)             # (B, T, C)

    # Elementwise (T == C): reciprocal-multiply instead of divide.
    attn_ref[...] = score * pl.reciprocal(scale, approx=False)
    mem_out_ref[...] = memory
    zeta_t_out_ref[...] = zeta_t


def linear_attention_cell(query, key, value, memory, zeta_t, *,
                          mxu_dtype=jnp.float32):
    """One forward step of LinearAttentionCell.

    State is surfaced functionally: returns (attention, new_memory, new_zeta_t).
    `zeta_t` is the transposed state zeta^T with shape (B, T, C); memory is
    (B, C, C).  Both state tensors are aliased in-place (input_output_aliases).
    """
    B, T, C = query.shape
    assert T == C, "score/scale broadcast in the reference requires T == C"
    assert memory.shape == (B, C, C)
    assert zeta_t.shape == (B, T, C)

    full_tc = pl.BlockSpec((B, T, C), lambda i: (0, 0, 0))
    full_cc = pl.BlockSpec((B, C, C), lambda i: (0, 0, 0))

    kernel = functools.partial(linear_attention_kernel, mxu_dtype=mxu_dtype)

    return pl.pallas_call(
        kernel,
        out_shape=(
            jax.ShapeDtypeStruct((B, T, C), jnp.float32),   # attention
            jax.ShapeDtypeStruct((B, C, C), jnp.float32),   # memory
            jax.ShapeDtypeStruct((B, T, C), jnp.float32),   # zeta^T
        ),
        grid=(1,),                                          # whole batch, one step
        in_specs=[full_tc, full_tc, full_tc, full_cc, full_tc],
        out_specs=(full_tc, full_cc, full_tc),
        input_output_aliases={3: 1, 4: 2},                  # memory, zeta in-place
        compiler_params=pltpu.CompilerParams(
            dimension_semantics=("arbitrary",)),
    )(query, key, value, memory, zeta_t)


def _reference(query, key, value, memory, zeta):
    """Pure-JAX reference in the original PyTorch layout (zeta is (B, C, T))."""
    q = _feature_map(query)
    k = _feature_map(key)
    delta_zeta = jnp.swapaxes(k, -2, -1)
    delta_memory = jnp.matmul(delta_zeta, value)
    memory = FORGET_RATE * memory + delta_memory
    zeta = FORGET_RATE * zeta + delta_zeta
    scale = jnp.matmul(q, zeta) + EPS
    score = jnp.matmul(q, memory)
    return score / scale, memory, zeta


if __name__ == "__main__":
    B, T, C = 2, 32, 32          # d_model = 32, seq = 32 (T == C, see layout note)

    key0 = jax.random.PRNGKey(0)
    kq, kk, kv = jax.random.split(key0, 3)
    query = jax.random.normal(kq, (B, T, C), dtype=jnp.float32)
    key_ = jax.random.normal(kk, (B, T, C), dtype=jnp.float32)
    value = jax.random.normal(kv, (B, T, C), dtype=jnp.float32)

    # Reference first (the kernel call donates the state buffers).
    r_attn, r_mem, r_zeta = _reference(
        query, key_, value,
        jnp.zeros((B, C, C), jnp.float32), jnp.zeros((B, C, T), jnp.float32))

    # fresh cell: self.memory = 0, self.zeta = 0 (zeta stored transposed)
    memory0 = jnp.zeros((B, C, C), dtype=jnp.float32)
    zeta0_t = jnp.zeros((B, T, C), dtype=jnp.float32)

    attn, mem1, zeta1_t = linear_attention_cell(query, key_, value, memory0, zeta0_t)
    jax.block_until_ready((attn, mem1, zeta1_t))

    assert jnp.allclose(attn, r_attn, rtol=1e-5, atol=1e-5)
    assert jnp.allclose(mem1, r_mem, rtol=1e-5, atol=1e-5)
    assert jnp.allclose(zeta1_t, jnp.swapaxes(r_zeta, -2, -1), rtol=1e-5, atol=1e-5)

    # second step reuses the returned state (PyTorch's apply_update)
    attn2, mem2, zeta2_t = linear_attention_cell(query, key_, value, mem1, zeta1_t)
    jax.block_until_ready((attn2, mem2, zeta2_t))
    r_attn2, r_mem2, r_zeta2 = _reference(query, key_, value, r_mem, r_zeta)
    assert jnp.allclose(attn2, r_attn2, rtol=1e-5, atol=1e-5)

    # Optional bf16-MXU-operand fast path (v6e/v7x feedback); state stays f32.
    attn_bf, _, _ = linear_attention_cell(
        query, key_, value,
        jnp.zeros((B, C, C), jnp.float32), jnp.zeros((B, T, C), jnp.float32),
        mxu_dtype=jnp.bfloat16)
    jax.block_until_ready(attn_bf)
    assert bool(jnp.all(jnp.isfinite(attn_bf)))
    rel_err = float(jnp.max(jnp.abs(attn_bf - r_attn)) /
                    (jnp.max(jnp.abs(r_attn)) + 1e-6))
    assert rel_err < 1e-1, rel_err   # bf16 operands, f32 accumulation

    # TODO(synk): use_rope branch (RoPE rotation) not exercised — module defaults to use_rope=False.
    print("KERNEL_OK")
</pallas_src>

<mosaic_0001>
module attributes {stable_mosaic.version = 11 : i64} {
  func.func @linear_attention_kernel(%arg0: i32, %arg1: memref<2x32x32xf32, #tpu.memory_space<vmem>>, %arg2: memref<2x32x32xf32, #tpu.memory_space<vmem>>, %arg3: memref<2x32x32xf32, #tpu.memory_space<vmem>>, %arg4: memref<2x32x32xf32, #tpu.memory_space<vmem>>, %arg5: memref<2x32x32xf32, #tpu.memory_space<vmem>>, %arg6: memref<2x32x32xf32, #tpu.memory_space<vmem>>, %arg7: memref<2x32x32xf32, #tpu.memory_space<vmem>>, %arg8: memref<2x32x32xf32, #tpu.memory_space<vmem>>) attributes {dimension_semantics = [#tpu.dimension_semantics<arbitrary>], iteration_bounds = array<i64: 1>, scalar_prefetch = 0 : i64, scratch_operands = 0 : i64, tpu.core_type = #tpu.core_type<tc>, window_params = [{pipeline_mode = #tpu.pipeline_mode<synchronous>, transform_indices = @transform_0, window_bounds = array<i64: 2, 32, 32>}, {pipeline_mode = #tpu.pipeline_mode<synchronous>, transform_indices = @transform_1, window_bounds = array<i64: 2, 32, 32>}, {pipeline_mode = #tpu.pipeline_mode<synchronous>, transform_indices = @transform_2, window_bounds = array<i64: 2, 32, 32>}, {pipeline_mode = #tpu.pipeline_mode<synchronous>, transform_indices = @transform_3, window_bounds = array<i64: 2, 32, 32>}, {pipeline_mode = #tpu.pipeline_mode<synchronous>, transform_indices = @transform_4, window_bounds = array<i64: 2, 32, 32>}, {pipeline_mode = #tpu.pipeline_mode<synchronous>, transform_indices = @transform_5, window_bounds = array<i64: 2, 32, 32>}, {pipeline_mode = #tpu.pipeline_mode<synchronous>, transform_indices = @transform_6, window_bounds = array<i64: 2, 32, 32>}, {pipeline_mode = #tpu.pipeline_mode<synchronous>, transform_indices = @transform_7, window_bounds = array<i64: 2, 32, 32>}]} {
    %c0 = arith.constant 0 : index
    %c0_0 = arith.constant 0 : index
    %c0_1 = arith.constant 0 : index
    %0 = vector.load %arg1[%c0, %c0_0, %c0_1] : memref<2x32x32xf32, #tpu.memory_space<vmem>>, vector<2x32x32xf32>
    %cst = arith.constant 0.000000e+00 : f32
    %1 = vector.broadcast %cst : f32 to vector<2x32x32xf32>
    %2 = arith.cmpf ogt, %0, %1 : vector<2x32x32xf32>
    %cst_2 = arith.constant 1.000000e+00 : f32
    %3 = vector.broadcast %cst_2 : f32 to vector<2x32x32xf32>
    %4 = arith.addf %0, %3 : vector<2x32x32xf32>
    %5 = math.exp %0 : vector<2x32x32xf32>
    %6 = arith.select %2, %4, %5 : vector<2x32x32xi1>, vector<2x32x32xf32>
    %7 = arith.mulf %6, %6 : vector<2x32x32xf32>
    %8 = arith.mulf %7, %7 : vector<2x32x32xf32>
    %9 = arith.mulf %8, %6 : vector<2x32x32xf32>
    %c0_3 = arith.constant 0 : index
    %c0_4 = arith.constant 0 : index
    %c0_5 = arith.constant 0 : index
    %10 = vector.load %arg2[%c0_3, %c0_4, %c0_5] : memref<2x32x32xf32, #tpu.memory_space<vmem>>, vector<2x32x32xf32>
    %cst_6 = arith.constant 0.000000e+00 : f32
    %11 = vector.broadcast %cst_6 : f32 to vector<2x32x32xf32>
    %12 = arith.cmpf ogt, %10, %11 : vector<2x32x32xf32>
    %cst_7 = arith.constant 1.000000e+00 : f32
    %13 = vector.broadcast %cst_7 : f32 to vector<2x32x32xf32>
    %14 = arith.addf %10, %13 : vector<2x32x32xf32>
    %15 = math.exp %10 : vector<2x32x32xf32>
    %16 = arith.select %12, %14, %15 : vector<2x32x32xi1>, vector<2x32x32xf32>
    %17 = arith.mulf %16, %16 : vector<2x32x32xf32>
    %18 = arith.mulf %17, %17 : vector<2x32x32xf32>
    %19 = arith.mulf %18, %16 : vector<2x32x32xf32>
    %c0_8 = arith.constant 0 : index
    %c0_9 = arith.constant 0 : index
    %c0_10 = arith.constant 0 : index
    %20 = vector.load %arg3[%c0_8, %c0_9, %c0_10] : memref<2x32x32xf32, #tpu.memory_space<vmem>>, vector<2x32x32xf32>
    "tpu.trace_start"() <{level = 10 : i32, message = "btc,btd->bcd"}> : () -> ()
    %cst_11 = arith.constant dense<0.000000e+00> : vector<2x32x32xf32>
    %21 = tpu.matmul %19, %20, %cst_11 {dimension_numbers = #tpu.dot_dimension_numbers<[1], [1], [2], [2], [0, 0, 0, 2, 1, 2], [0], [0]>} : vector<2x32x32xf32>, vector<2x32x32xf32>, vector<2x32x32xf32> -> vector<2x32x32xf32>
    "tpu.trace_stop"() : () -> ()
    %c0_12 = arith.constant 0 : index
    %c0_13 = arith.constant 0 : index
    %c0_14 = arith.constant 0 : index
    %22 = vector.load %arg4[%c0_12, %c0_13, %c0_14] : memref<2x32x32xf32, #tpu.memory_space<vmem>>, vector<2x32x32xf32>
    %cst_15 = arith.constant 0.99999988 : f32
    %23 = vector.broadcast %cst_15 : f32 to vector<2x32x32xf32>
    %24 = arith.mulf %23, %22 : vector<2x32x32xf32>
    %25 = arith.addf %24, %21 : vector<2x32x32xf32>
    %c0_16 = arith.constant 0 : index
    %c0_17 = arith.constant 0 : index
    %c0_18 = arith.constant 0 : index
    %26 = vector.load %arg5[%c0_16, %c0_17, %c0_18] : memref<2x32x32xf32, #tpu.memory_space<vmem>>, vector<2x32x32xf32>
    %cst_19 = arith.constant 0.99999988 : f32
    %27 = vector.broadcast %cst_19 : f32 to vector<2x32x32xf32>
    %28 = arith.mulf %27, %26 : vector<2x32x32xf32>
    %29 = arith.addf %28, %19 : vector<2x32x32xf32>
    "tpu.trace_start"() <{level = 10 : i32, message = "btc,bsc->bts"}> : () -> ()
    %cst_20 = arith.constant dense<0.000000e+00> : vector<2x32x32xf32>
    %30 = tpu.matmul %9, %29, %cst_20 {dimension_numbers = #tpu.dot_dimension_numbers<[2], [2], [1], [1], [0, 0, 0, 1, 1, 1], [0], [0]>} : vector<2x32x32xf32>, vector<2x32x32xf32>, vector<2x32x32xf32> -> vector<2x32x32xf32>
    "tpu.trace_stop"() : () -> ()
    %cst_21 = arith.constant 9.99999993E-9 : f32
    %31 = vector.broadcast %cst_21 : f32 to vector<2x32x32xf32>
    %32 = arith.addf %30, %31 : vector<2x32x32xf32>
    "tpu.trace_start"() <{level = 10 : i32, message = "btc,bcd->btd"}> : () -> ()
    %cst_22 = arith.constant dense<0.000000e+00> : vector<2x32x32xf32>
    %33 = tpu.matmul %9, %25, %cst_22 {dimension_numbers = #tpu.dot_dimension_numbers<[2], [1], [1], [2], [0, 0, 0, 1, 1, 2], [0], [0]>} : vector<2x32x32xf32>, vector<2x32x32xf32>, vector<2x32x32xf32> -> vector<2x32x32xf32>
    "tpu.trace_stop"() : () -> ()
    %34 = tpu.reciprocal %32 : vector<2x32x32xf32> -> vector<2x32x32xf32>
    %35 = arith.mulf %33, %34 : vector<2x32x32xf32>
    %c0_23 = arith.constant 0 : index
    %c0_24 = arith.constant 0 : index
    %c0_25 = arith.constant 0 : index
    %36 = vector.load %arg6[%c0_23, %c0_24, %c0_25] : memref<2x32x32xf32, #tpu.memory_space<vmem>>, vector<2x32x32xf32>
    tpu.vector_store %arg6[%c0_23, %c0_24, %c0_25], %35 {strides = array<i32>} : memref<2x32x32xf32, #tpu.memory_space<vmem>>, vector<2x32x32xf32>,
    %c0_26 = arith.constant 0 : index
    %c0_27 = arith.constant 0 : index
    %c0_28 = arith.constant 0 : index
    %37 = vector.load %arg7[%c0_26, %c0_27, %c0_28] : memref<2x32x32xf32, #tpu.memory_space<vmem>>, vector<2x32x32xf32>
    tpu.vector_store %arg7[%c0_26, %c0_27, %c0_28], %25 {strides = array<i32>} : memref<2x32x32xf32, #tpu.memory_space<vmem>>, vector<2x32x32xf32>,
    %c0_29 = arith.constant 0 : index
    %c0_30 = arith.constant 0 : index
    %c0_31 = arith.constant 0 : index
    %38 = vector.load %arg8[%c0_29, %c0_30, %c0_31] : memref<2x32x32xf32, #tpu.memory_space<vmem>>, vector<2x32x32xf32>
    tpu.vector_store %arg8[%c0_29, %c0_30, %c0_31], %29 {strides = array<i32>} : memref<2x32x32xf32, #tpu.memory_space<vmem>>, vector<2x32x32xf32>,
    return
  }
  func.func @transform_0(%arg0: i32) -> (i32, i32, i32) {
    %c0_i32 = arith.constant 0 : i32
    %c0_i32_0 = arith.constant 0 : i32
    %c0_i32_1 = arith.constant 0 : i32
    %c0_i32_2 = arith.constant 0 : i32
    return %c0_i32, %c0_i32_0, %c0_i32_1 : i32, i32, i32
  }
  func.func @transform_1(%arg0: i32) -> (i32, i32, i32) {
    %c0_i32 = arith.constant 0 : i32
    %c0_i32_0 = arith.constant 0 : i32
    %c0_i32_1 = arith.constant 0 : i32
    %c0_i32_2 = arith.constant 0 : i32
    return %c0_i32, %c0_i32_0, %c0_i32_1 : i32, i32, i32
  }
  func.func @transform_2(%arg0: i32) -> (i32, i32, i32) {
    %c0_i32 = arith.constant 0 : i32
    %c0_i32_0 = arith.constant 0 : i32
    %c0_i32_1 = arith.constant 0 : i32
    %c0_i32_2 = arith.constant 0 : i32
    return %c0_i32, %c0_i32_0, %c0_i32_1 : i32, i32, i32
  }
  func.func @transform_3(%arg0: i32) -> (i32, i32, i32) {
    %c0_i32 = arith.constant 0 : i32
    %c0_i32_0 = arith.constant 0 : i32
    %c0_i32_1 = arith.constant 0 : i32
    %c0_i32_2 = arith.constant 0 : i32
    return %c0_i32, %c0_i32_0, %c0_i32_1 : i32, i32, i32
  }
  func.func @transform_4(%arg0: i32) -> (i32, i32, i32) {
    %c0_i32 = arith.constant 0 : i32
    %c0_i32_0 = arith.constant 0 : i32
    %c0_i32_1 = arith.constant 0 : i32
    %c0_i32_2 = arith.constant 0 : i32
    return %c0_i32, %c0_i32_0, %c0_i32_1 : i32, i32, i32
  }
  func.func @transform_5(%arg0: i32) -> (i32, i32, i32) {
    %c0_i32 = arith.constant 0 : i32
    %c0_i32_0 = arith.constant 0 : i32
    %c0_i32_1 = arith.constant 0 : i32
    %c0_i32_2 = arith.constant 0 : i32
    return %c0_i32, %c0_i32_0, %c0_i32_1 : i32, i32, i32
  }
  func.func @transform_6(%arg0: i32) -> (i32, i32, i32) {
    %c0_i32 = arith.constant 0 : i32
    %c0_i32_0 = arith.constant 0 : i32
    %c0_i32_1 = arith.constant 0 : i32
    %c0_i32_2 = arith.constant 0 : i32
    return %c0_i32, %c0_i32_0, %c0_i32_1 : i32, i32, i32
  }
  func.func @transform_7(%arg0: i32) -> (i32, i32, i32) {
    %c0_i32 = arith.constant 0 : i32
    %c0_i32_0 = arith.constant 0 : i32
    %c0_i32_1 = arith.constant 0 : i32
    %c0_i32_2 = arith.constant 0 : i32
    return %c0_i32, %c0_i32_0, %c0_i32_1 : i32, i32, i32
  }
}

</mosaic_0001>

<llo_original>
// kernel: tpu_custom_call.1
$region0: #{tpu_custom_call.1}
  #allocation0 [shape = 'u32[]', space=smem, size = 0x4, offset = 0x4, fixed_abs, tag = 'smem constant byte address 0x4 - core index']
  #allocation1 [shape = 'u32[144,128]{1,0:T(1,128)}', space=vmem, size = 0x12000, scoped, tag = 'internal scratch']
  %s0 = inlined_call_operand.vmem [shape: f32[2,32,32], index: 0, kind: input, shape index: {}]
  %s1 = inlined_call_operand.vmem [shape: f32[2,32,32], index: 1, kind: input, shape index: {}]
  %s2 = inlined_call_operand.vmem [shape: f32[2,32,32], index: 2, kind: input, shape index: {}]
  %s3 = inlined_call_operand.hbm [shape: f32[2,32,32], index: 3, kind: input, shape index: {}, may-alias: {3,6}]
  %s4 = inlined_call_operand.hbm [shape: f32[2,32,32], index: 4, kind: input, shape index: {}, may-alias: {4,7}]
  %s5 = inlined_call_operand.hbm [shape: f32[2,32,32], index: 5, kind: output, shape index: {0}]
  %s6 = inlined_call_operand.hbm [shape: f32[2,32,32], index: 6, kind: output, shape index: {1}, may-alias: {3,6}]
  %s7 = inlined_call_operand.hbm [shape: f32[2,32,32], index: 7, kind: output, shape index: {2}, may-alias: {4,7}]
  %8 = xla_tuple %s5, %s6, %s7
  %s9 = sld [smem:[#allocation0]]
  $region54: #{tpu_custom_call.1} parent=0
    _
  %s11 = ssub.s32 1, %s9
  %s12 = scalar_select 0, %s11, %s9
  $region1: #{tpu_custom_call.1} parent=0
    #allocation2 [shape = 'u8[32768]{0}', space=vmem, size = 0x8000, scoped, tag = 'input window, operand 3, single buffered']
    #allocation3 [shape = 's32[1]{0}', space=sflag, size = 0x4, scoped, tag = 'scoped memory for tpu_custom_call.1']
    #allocation4 [shape = 's32[1]{0}', space=sflag, size = 0x4, scoped, tag = 'scoped memory for tpu_custom_call.1']
    #allocation5 [shape = 'u8[32768]{0}', space=vmem, size = 0x8000, scoped, tag = 'input window, operand 4, single buffered']
    #allocation6 [shape = 's32[1]{0}', space=sflag, size = 0x4, scoped, tag = 'scoped memory for tpu_custom_call.1']
    #allocation7 [shape = 'u8[32768]{0}', space=vmem, size = 0x8000, scoped, tag = 'output window, operand 0, single buffered']
    #allocation8 [shape = 'u8[32768]{0}', space=vmem, size = 0x8000, scoped, tag = 'output window, operand 1, single buffered']
    #allocation9 [shape = 's32[1]{0}', space=sflag, size = 0x4, scoped, tag = 'scoped memory for tpu_custom_call.1']
    #allocation10 [shape = 'u8[32768]{0}', space=vmem, size = 0x8000, scoped, tag = 'output window, operand 2, single buffered']
    %13 = vsyncpa [#allocation3], 0
    %14 = vsyncpa [#allocation6], 0
    %15 = vsyncpa [#allocation4], 0
    %16 = vsyncpa [#allocation9], 0
    // Predicated region
    $region2: #{tpu_custom_call.1} parent=1 // pred_check
      _
    $region3: #{tpu_custom_call.1} parent=1 // pred_check_branch
      %18 = sbr.rel (0) target = $region5
    $region4: #{tpu_custom_call.1} parent=1 // pred_region
      _
    $region5: #{tpu_custom_call.1} parent=1 // pred_fallthru
      _
    // Predicated region
    $region6: #{tpu_custom_call.1} parent=1 // pred_check
      _
    $region7: #{tpu_custom_call.1} parent=1 // pred_check_branch
      %20 = sbr.rel (0) target = $region9
    $region8: #{tpu_custom_call.1} parent=1 // pred_region
      _
    $region9: #{tpu_custom_call.1} parent=1 // pred_fallthru
      _
    // Predicated region
    $region10: #{tpu_custom_call.1} parent=1 // pred_check
      _
    $region11: #{tpu_custom_call.1} parent=1 // pred_check_branch
      %22 = sbr.rel (0) target = $region13
    $region12: #{tpu_custom_call.1} parent=1 // pred_region
      _
    $region13: #{tpu_custom_call.1} parent=1 // pred_fallthru
      _
    // Predicated region
    $region14: #{tpu_custom_call.1} parent=1 // pred_check
      _
    $region15: #{tpu_custom_call.1} parent=1 // pred_check_branch
      %24 = sbr.rel (0) target = $region17
    $region16: #{tpu_custom_call.1} parent=1 // pred_region
      %s26 = ssub.s32 1024, 1024
      %27 = vsyncadd [#allocation3], %s26
      %s28 = sshll.u32 [#allocation2], 4
      %s29 = int_to_ptr.vmem [resolvable:$true] %s28
      %34 = dma.hbm_to_vmem [thread:$0]  %s3, 1024, %s29, [#allocation3], 128, 128, 8
    $region17: #{tpu_custom_call.1} parent=1 // pred_fallthru
      _
    // Predicated region
    $region18: #{tpu_custom_call.1} parent=1 // pred_check
      _
    $region19: #{tpu_custom_call.1} parent=1 // pred_check_branch
      %36 = sbr.rel (0) target = $region21
    $region20: #{tpu_custom_call.1} parent=1 // pred_region
      %s38 = ssub.s32 1024, 1024
      %39 = vsyncadd [#allocation6], %s38
      %s40 = sshll.u32 [#allocation5], 4
      %s41 = int_to_ptr.vmem [resolvable:$true] %s40
      %46 = dma.hbm_to_vmem [thread:$0]  %s4, 1024, %s41, [#allocation6], 128, 128, 8
    $region21: #{tpu_custom_call.1} parent=1 // pred_fallthru
      _
    // Predicated region
    $region22: #{tpu_custom_call.1} parent=1 // pred_check
      _
    $region23: #{tpu_custom_call.1} parent=1 // pred_check_branch
      %48 = sbr.rel (0) target = $region25
    $region24: #{tpu_custom_call.1} parent=1 // pred_region
      %49 = dma.done [#allocation3], 1024
    $region25: #{tpu_custom_call.1} parent=1 // pred_fallthru
      _
    // Predicated region
    $region26: #{tpu_custom_call.1} parent=1 // pred_check
      _
    $region27: #{tpu_custom_call.1} parent=1 // pred_check_branch
      %51 = sbr.rel (0) target = $region29
    $region28: #{tpu_custom_call.1} parent=1 // pred_region
      %52 = dma.done [#allocation6], 1024
    $region29: #{tpu_custom_call.1} parent=1 // pred_fallthru
      _
    %v53 = vld [vmem:[%s0] sm:$0xff]
    %v54 = vld [vmem:[%s0 + $0x8] sm:$0xff]
    %v55 = vld [vmem:[%s0 + $0x10] sm:$0xff]
    %v56 = vld [vmem:[%s0 + $0x18] sm:$0xff]
    %v57 = vld [vmem:[%s0 + $0x20] sm:$0xff]
    %v58 = vld [vmem:[%s0 + $0x28] sm:$0xff]
    %v59 = vld [vmem:[%s0 + $0x30] sm:$0xff]
    %v60 = vld [vmem:[%s0 + $0x38] sm:$0xff]
    %vm61 = vcmp.gt.f32.partialorder %v53, 0.0
    %vm62 = vcmp.gt.f32.partialorder %v54, 0.0
    %vm63 = vcmp.gt.f32.partialorder %v55, 0.0
    %vm64 = vcmp.gt.f32.partialorder %v56, 0.0
    %vm65 = vcmp.gt.f32.partialorder %v57, 0.0
    %vm66 = vcmp.gt.f32.partialorder %v58, 0.0
    %vm67 = vcmp.gt.f32.partialorder %v59, 0.0
    %vm68 = vcmp.gt.f32.partialorder %v60, 0.0
    %v69 = vadd.f32 %v53, 1.0
    %v70 = vadd.f32 %v54, 1.0
    %v71 = vadd.f32 %v55, 1.0
    %v72 = vadd.f32 %v56, 1.0
    %v73 = vadd.f32 %v57, 1.0
    %v74 = vadd.f32 %v58, 1.0
    %v75 = vadd.f32 %v59, 1.0
    %v76 = vadd.f32 %v60, 1.0
    %v77 = vmul.f32 %v53, 1.442695
    %v78 = vpow.pop %v77
    %v79 = vmul.f32 %v54, 1.442695
    %v80 = vpow.pop %v79
    %v81 = vmul.f32 %v55, 1.442695
    %v82 = vpow.pop %v81
    %v83 = vmul.f32 %v56, 1.442695
    %v84 = vpow.pop %v83
    %v85 = vmul.f32 %v57, 1.442695
    %v86 = vpow.pop %v85
    %v87 = vmul.f32 %v58, 1.442695
    %v88 = vpow.pop %v87
    %v89 = vmul.f32 %v59, 1.442695
    %v90 = vpow.pop %v89
    %v91 = vmul.f32 %v60, 1.442695
    %v92 = vpow.pop %v91
    %v93 = vsel %vm61, %v69, %v78
    %v94 = vsel %vm62, %v70, %v80
    %v95 = vsel %vm63, %v71, %v82
    %v96 = vsel %vm64, %v72, %v84
    %v97 = vsel %vm65, %v73, %v86
    %v98 = vsel %vm66, %v74, %v88
    %v99 = vsel %vm67, %v75, %v90
    %v100 = vsel %vm68, %v76, %v92
    %v101 = vmul.f32 %v93, %v93
    %v102 = vmul.f32 %v94, %v94
    %v103 = vmul.f32 %v95, %v95
    %v104 = vmul.f32 %v96, %v96
    %v105 = vmul.f32 %v97, %v97
    %v106 = vmul.f32 %v98, %v98
    %v107 = vmul.f32 %v99, %v99
    %v108 = vmul.f32 %v100, %v100
    %v109 = vmul.f32 %v101, %v101
    %v110 = vmul.f32 %v102, %v102
    %v111 = vmul.f32 %v103, %v103
    %v112 = vmul.f32 %v104, %v104
    %v113 = vmul.f32 %v105, %v105
    %v114 = vmul.f32 %v106, %v106
    %v115 = vmul.f32 %v107, %v107
    %v116 = vmul.f32 %v108, %v108
    %v117 = vmul.f32 %v109, %v93
    %v118 = vmul.f32 %v110, %v94
    %v119 = vmul.f32 %v111, %v95
    %v120 = vmul.f32 %v112, %v96
    %v121 = vmul.f32 %v113, %v97
    %v122 = vmul.f32 %v114, %v98
    %v123 = vmul.f32 %v115, %v99
    %v124 = vmul.f32 %v116, %v100
    %v125 = vld [vmem:[%s1] sm:$0xff]
    %v126 = vld [vmem:[%s1 + $0x8] sm:$0xff]
    %v127 = vld [vmem:[%s1 + $0x10] sm:$0xff]
    %v128 = vld [vmem:[%s1 + $0x18] sm:$0xff]
    %v129 = vld [vmem:[%s1 + $0x20] sm:$0xff]
    %v130 = vld [vmem:[%s1 + $0x28] sm:$0xff]
    %v131 = vld [vmem:[%s1 + $0x30] sm:$0xff]
    %v132 = vld [vmem:[%s1 + $0x38] sm:$0xff]
    %vm133 = vcmp.gt.f32.partialorder %v125, 0.0
    %vm134 = vcmp.gt.f32.partialorder %v126, 0.0
    %vm135 = vcmp.gt.f32.partialorder %v127, 0.0
    %vm136 = vcmp.gt.f32.partialorder %v128, 0.0
    %vm137 = vcmp.gt.f32.partialorder %v129, 0.0
    %vm138 = vcmp.gt.f32.partialorder %v130, 0.0
    %vm139 = vcmp.gt.f32.partialorder %v131, 0.0
    %vm140 = vcmp.gt.f32.partialorder %v132, 0.0
    %v141 = vadd.f32 %v125, 1.0
    %v142 = vadd.f32 %v126, 1.0
    %v143 = vadd.f32 %v127, 1.0
    %v144 = vadd.f32 %v128, 1.0
    %v145 = vadd.f32 %v129, 1.0
    %v146 = vadd.f32 %v130, 1.0
    %v147 = vadd.f32 %v131, 1.0
    %v148 = vadd.f32 %v132, 1.0
    %v149 = vmul.f32 %v125, 1.442695
    %v150 = vpow.pop %v149
    %v151 = vmul.f32 %v126, 1.442695
    %v152 = vpow.pop %v151
    %v153 = vmul.f32 %v127, 1.442695
    %v154 = vpow.pop %v153
    %v155 = vmul.f32 %v128, 1.442695
    %v156 = vpow.pop %v155
    %v157 = vmul.f32 %v129, 1.442695
    %v158 = vpow.pop %v157
    %v159 = vmul.f32 %v130, 1.442695
    %v160 = vpow.pop %v159
    %v161 = vmul.f32 %v131, 1.442695
    %v162 = vpow.pop %v161
    %v163 = vmul.f32 %v132, 1.442695
    %v164 = vpow.pop %v163
    %v165 = vsel %vm133, %v141, %v150
    %v166 = vsel %vm134, %v142, %v152
    %v167 = vsel %vm135, %v143, %v154
    %v168 = vsel %vm136, %v144, %v156
    %v169 = vsel %vm137, %v145, %v158
    %v170 = vsel %vm138, %v146, %v160
    %v171 = vsel %vm139, %v147, %v162
    %v172 = vsel %vm140, %v148, %v164
    %v173 = vmul.f32 %v165, %v165
    %v174 = vmul.f32 %v166, %v166
    %v175 = vmul.f32 %v167, %v167
    %v176 = vmul.f32 %v168, %v168
    %v177 = vmul.f32 %v169, %v169
    %v178 = vmul.f32 %v170, %v170
    %v179 = vmul.f32 %v171, %v171
    %v180 = vmul.f32 %v172, %v172
    %v181 = vmul.f32 %v173, %v173
    %v182 = vmul.f32 %v174, %v174
    %v183 = vmul.f32 %v175, %v175
    %v184 = vmul.f32 %v176, %v176
    %v185 = vmul.f32 %v177, %v177
    %v186 = vmul.f32 %v178, %v178
    %v187 = vmul.f32 %v179, %v179
    %v188 = vmul.f32 %v180, %v180
    %v189 = vmul.f32 %v181, %v165
    %v190 = vmul.f32 %v182, %v166
    %v191 = vmul.f32 %v183, %v167
    %v192 = vmul.f32 %v184, %v168
    %v193 = vmul.f32 %v185, %v169
    %v194 = vmul.f32 %v186, %v170
    %v195 = vmul.f32 %v187, %v171
    %v196 = vmul.f32 %v188, %v172
    %v197 = vld [vmem:[%s2] sm:$0xff]
    %v198 = vld [vmem:[%s2 + $0x8] sm:$0xff]
    %v199 = vld [vmem:[%s2 + $0x10] sm:$0xff]
    %v200 = vld [vmem:[%s2 + $0x18] sm:$0xff]
    %v201 = vld [vmem:[%s2 + $0x20] sm:$0xff]
    %v202 = vld [vmem:[%s2 + $0x28] sm:$0xff]
    %v203 = vld [vmem:[%s2 + $0x30] sm:$0xff]
    %v204 = vld [vmem:[%s2 + $0x38] sm:$0xff]
    %205 = vxpose.xlu0.b32.start [1/16] %v189, 128
    %206 = vxpose.xlu0.b32.cont [2/16] %v190, 128
    %207 = vxpose.xlu0.b32.cont [3/16] %v191, 128
    %208 = vxpose.xlu0.b32.cont [4/16] %v192, 128
    %209 = vxpose.xlu0.b32.cont [5/16] 0.0, 128
    %210 = vxpose.xlu0.b32.cont [6/16] 0.0, 128
    %211 = vxpose.xlu0.b32.cont [7/16] 0.0, 128
    %212 = vxpose.xlu0.b32.cont [8/16] 0.0, 128
    %213 = vxpose.xlu0.b32.cont [9/16] 0.0, 128
    %214 = vxpose.xlu0.b32.cont [10/16] 0.0, 128
    %215 = vxpose.xlu0.b32.cont [11/16] 0.0, 128
    %216 = vxpose.xlu0.b32.cont [12/16] 0.0, 128
    %217 = vxpose.xlu0.b32.cont [13/16] 0.0, 128
    %218 = vxpose.xlu0.b32.cont [14/16] 0.0, 128
    %219 = vxpose.xlu0.b32.cont [15/16] 0.0, 128
    %220 = vxpose.xlu0.b32.end [16/16] 0.0, 128
    %v221 = vpop.trf.xlu0
    %v222 = vpop.trf.xlu0
    %v223 = vpop.trf.xlu0
    %v224 = vpop.trf.xlu0
    %v225 = vpop.trf.xlu0
    %v226 = vpop.trf.xlu0
    %v227 = vpop.trf.xlu0
    %v228 = vpop.trf.xlu0
    %v229 = vpop.trf.xlu0
    %v230 = vpop.trf.xlu0
    %v231 = vpop.trf.xlu0
    %v232 = vpop.trf.xlu0
    %v233 = vpop.trf.xlu0
    %v234 = vpop.trf.xlu0
    %v235 = vpop.trf.xlu0
    %v236 = vpop.trf.xlu0
    %vm237 = vcmask 261120
    %v239 = vsel %vm237, %v221, 0
    %v242 = vsel %vm237, %v222, 0
    %v245 = vsel %vm237, %v223, 0
    %v248 = vsel %vm237, %v224, 0
    %250 = vmatprep.subr.mxu0 0.0
    %251 = vmatpush1.msra.mxu0 %v197
    %252 = vmatprep.subr.mxu0 0.0
    %253 = vmatpush1.msra.mxu0 %v198
    %254 = vmatprep.subr.mxu0 0.0
    %255 = vmatpush1.msra.mxu0 %v199
    %256 = vmatprep.subr.mxu0 0.0
    %257 = vmatpush1.msra.mxu0 %v200
    %258 = vmatprep.subr.mxu0 0.0
    %259 = vmatpush1.msra.mxu0 0.0
    %260 = vmatprep.subr.mxu0 0.0
    %261 = vmatpush1.msra.mxu0 0.0
    %262 = vmatprep.subr.mxu0 0.0
    %263 = vmatpush1.msra.mxu0 0.0
    %264 = vmatprep.subr.mxu0 0.0
    %265 = vmatpush1.msra.mxu0 0.0
    %266 = vmatprep.subr.mxu0 0.0
    %267 = vmatpush1.msra.mxu0 0.0
    %268 = vmatprep.subr.mxu0 0.0
    %269 = vmatpush1.msra.mxu0 0.0
    %270 = vmatprep.subr.mxu0 0.0
    %271 = vmatpush1.msra.mxu0 0.0
    %272 = vmatprep.subr.mxu0 0.0
    %273 = vmatpush1.msra.mxu0 0.0
    %274 = vmatprep.subr.mxu0 0.0
    %275 = vmatpush1.msra.mxu0 0.0
    %276 = vmatprep.subr.mxu0 0.0
    %277 = vmatpush1.msra.mxu0 0.0
    %278 = vmatprep.subr.mxu0 0.0
    %279 = vmatpush1.msra.mxu0 0.0
    %280 = vmatprep.subr.mxu0 0.0
    %281 = vmatpush1.msra.mxu0 0.0
    %282 = vmatprep.subr.mxu0 0.0
    %283 = vmatpush1.msra.mxu0 0.0
    %284 = vmatprep.subr.mxu0 0.0
    %285 = vmatpush1.msra.mxu0 0.0
    %286 = vmatprep.subr.mxu0 0.0
    %287 = vmatpush1.msra.mxu0 0.0
    %288 = vmatprep.subr.mxu0 0.0
    %289 = vmatpush1.msra.mxu0 0.0
    %290 = vmatprep.subr.mxu0 0.0
    %291 = vmatpush1.msra.mxu0 0.0
    %292 = vmatprep.subr.mxu0 0.0
    %293 = vmatpush1.msra.mxu0 0.0
    %294 = vmatprep.subr.mxu0 0.0
    %295 = vmatpush1.msra.mxu0 0.0
    %296 = vmatprep.subr.mxu0 0.0
    %297 = vmatpush1.msra.mxu0 0.0
    %298 = vmatprep.subr.mxu0 0.0
    %299 = vmatpush1.msra.mxu0 0.0
    %300 = vmatprep.subr.mxu0 0.0
    %301 = vmatpush1.msra.mxu0 0.0
    %302 = vmatprep.subr.mxu0 0.0
    %303 = vmatpush1.msra.mxu0 0.0
    %304 = vmatprep.subr.mxu0 0.0
    %305 = vmatpush1.msra.mxu0 0.0
    %306 = vmatprep.subr.mxu0 0.0
    %307 = vmatpush1.msra.mxu0 0.0
    %308 = vmatprep.subr.mxu0 0.0
    %309 = vmatpush1.msra.mxu0 0.0
    %310 = vmatprep.subr.mxu0 0.0
    %311 = vmatpush1.msra.mxu0 0.0
    %312 = vmatprep.subr.mxu0 0.0
    %313 = vmatpush1.msra.mxu0 0.0
    %314 = vmatprep.mubr.f32.mxu0 0.0
    %315 = vmatmul.mubr.f32.gmra.mrb[0].mxu0 %v239
    %v316 = vpop.f32.mrb[0].mxu0
    %v317 = vadd.f32 0.0, %v316
    %v318 = vpop.f32.mrb[0].mxu0
    %319 = vmatprep.mubr.f32.mxu0 0.0
    %320 = vmatmul.mubr.f32.gmra.mrb[0].mxu0 %v242
    %v321 = vpop.f32.mrb[0].mxu0
    %v322 = vadd.f32 0.0, %v321
    %v323 = vpop.f32.mrb[0].mxu0
    %324 = vmatprep.mubr.f32.mxu0 0.0
    %325 = vmatmul.mubr.f32.gmra.mrb[0].mxu0 %v245
    %v326 = vpop.f32.mrb[0].mxu0
    %v327 = vadd.f32 0.0, %v326
    %v328 = vpop.f32.mrb[0].mxu0
    %329 = vmatprep.mubr.f32.mxu0 0.0
    %330 = vmatmul.mubr.f32.gmra.mrb[0].mxu0 %v248
    %v331 = vpop.f32.mrb[0].mxu0
    %v332 = vadd.f32 0.0, %v331
    %v333 = vpop.f32.mrb[0].mxu0
    %334 = vdwg.mxu0
    %335 = vxpose.xlu0.b32.start [1/16] %v193, 128
    %336 = vxpose.xlu0.b32.cont [2/16] %v194, 128
    %337 = vxpose.xlu0.b32.cont [3/16] %v195, 128
    %338 = vxpose.xlu0.b32.cont [4/16] %v196, 128
    %339 = vxpose.xlu0.b32.cont [5/16] 0.0, 128
    %340 = vxpose.xlu0.b32.cont [6/16] 0.0, 128
    %341 = vxpose.xlu0.b32.cont [7/16] 0.0, 128
    %342 = vxpose.xlu0.b32.cont [8/16] 0.0, 128
    %343 = vxpose.xlu0.b32.cont [9/16] 0.0, 128
    %344 = vxpose.xlu0.b32.cont [10/16] 0.0, 128
    %345 = vxpose.xlu0.b32.cont [11/16] 0.0, 128
    %346 = vxpose.xlu0.b32.cont [12/16] 0.0, 128
    %347 = vxpose.xlu0.b32.cont [13/16] 0.0, 128
    %348 = vxpose.xlu0.b32.cont [14/16] 0.0, 128
    %349 = vxpose.xlu0.b32.cont [15/16] 0.0, 128
    %350 = vxpose.xlu0.b32.end [16/16] 0.0, 128
    %v351 = vpop.trf.xlu0
    %v352 = vpop.trf.xlu0
    %v353 = vpop.trf.xlu0
    %v354 = vpop.trf.xlu0
    %v355 = vpop.trf.xlu0
    %v356 = vpop.trf.xlu0
    %v357 = vpop.trf.xlu0
    %v358 = vpop.trf.xlu0
    %v359 = vpop.trf.xlu0
    %v360 = vpop.trf.xlu0
    %v361 = vpop.trf.xlu0
    %v362 = vpop.trf.xlu0
    %v363 = vpop.trf.xlu0
    %v364 = vpop.trf.xlu0
    %v365 = vpop.trf.xlu0
    %v366 = vpop.trf.xlu0
    %v368 = vsel %vm237, %v351, 0
    %v371 = vsel %vm237, %v352, 0
    %v374 = vsel %vm237, %v353, 0
    %v377 = vsel %vm237, %v354, 0
    %379 = vmatprep.subr.mxu0 0.0
    %380 = vmatpush1.msra.mxu0 %v201
    %381 = vmatprep.subr.mxu0 0.0
    %382 = vmatpush1.msra.mxu0 %v202
    %383 = vmatprep.subr.mxu0 0.0
    %384 = vmatpush1.msra.mxu0 %v203
    %385 = vmatprep.subr.mxu0 0.0
    %386 = vmatpush1.msra.mxu0 %v204
    %387 = vmatprep.subr.mxu0 0.0
    %388 = vmatpush1.msra.mxu0 0.0
    %389 = vmatprep.subr.mxu0 0.0
    %390 = vmatpush1.msra.mxu0 0.0
    %391 = vmatprep.subr.mxu0 0.0
    %392 = vmatpush1.msra.mxu0 0.0
    %393 = vmatprep.subr.mxu0 0.0
    %394 = vmatpush1.msra.mxu0 0.0
    %395 = vmatprep.subr.mxu0 0.0
    %396 = vmatpush1.msra.mxu0 0.0
    %397 = vmatprep.subr.mxu0 0.0
    %398 = vmatpush1.msra.mxu0 0.0
    %399 = vmatprep.subr.mxu0 0.0
    %400 = vmatpush1.msra.mxu0 0.0
    %401 = vmatprep.subr.mxu0 0.0
    %402 = vmatpush1.msra.mxu0 0.0
    %403 = vmatprep.subr.mxu0 0.0
    %404 = vmatpush1.msra.mxu0 0.0
    %405 = vmatprep.subr.mxu0 0.0
    %406 = vmatpush1.msra.mxu0 0.0
    %407 = vmatprep.subr.mxu0 0.0
    %408 = vmatpush1.msra.mxu0 0.0
    %409 = vmatprep.subr.mxu0 0.0
    %410 = vmatpush1.msra.mxu0 0.0
    %411 = vmatprep.subr.mxu0 0.0
    %412 = vmatpush1.msra.mxu0 0.0
    %413 = vmatprep.subr.mxu0 0.0
    %414 = vmatpush1.msra.mxu0 0.0
    %415 = vmatprep.subr.mxu0 0.0
    %416 = vmatpush1.msra.mxu0 0.0
    %417 = vmatprep.subr.mxu0 0.0
    %418 = vmatpush1.msra.mxu0 0.0
    %419 = vmatprep.subr.mxu0 0.0
    %420 = vmatpush1.msra.mxu0 0.0
    %421 = vmatprep.subr.mxu0 0.0
    %422 = vmatpush1.msra.mxu0 0.0
    %423 = vmatprep.subr.mxu0 0.0
    %424 = vmatpush1.msra.mxu0 0.0
    %425 = vmatprep.subr.mxu0 0.0
    %426 = vmatpush1.msra.mxu0 0.0
    %427 = vmatprep.subr.mxu0 0.0
    %428 = vmatpush1.msra.mxu0 0.0
    %429 = vmatprep.subr.mxu0 0.0
    %430 = vmatpush1.msra.mxu0 0.0
    %431 = vmatprep.subr.mxu0 0.0
    %432 = vmatpush1.msra.mxu0 0.0
    %433 = vmatprep.subr.mxu0 0.0
    %434 = vmatpush1.msra.mxu0 0.0
    %435 = vmatprep.subr.mxu0 0.0
    %436 = vmatpush1.msra.mxu0 0.0
    %437 = vmatprep.subr.mxu0 0.0
    %438 = vmatpush1.msra.mxu0 0.0
    %439 = vmatprep.subr.mxu0 0.0
    %440 = vmatpush1.msra.mxu0 0.0
    %441 = vmatprep.subr.mxu0 0.0
    %442 = vmatpush1.msra.mxu0 0.0
    %443 = vmatprep.mubr.f32.mxu0 0.0
    %444 = vmatmul.mubr.f32.gmra.mrb[0].mxu0 %v368
    %v445 = vpop.f32.mrb[0].mxu0
    %v446 = vadd.f32 0.0, %v445
    %v447 = vpop.f32.mrb[0].mxu0
    %448 = vmatprep.mubr.f32.mxu0 0.0
    %449 = vmatmul.mubr.f32.gmra.mrb[0].mxu0 %v371
    %v450 = vpop.f32.mrb[0].mxu0
    %v451 = vadd.f32 0.0, %v450
    %v452 = vpop.f32.mrb[0].mxu0
    %453 = vmatprep.mubr.f32.mxu0 0.0
    %454 = vmatmul.mubr.f32.gmra.mrb[0].mxu0 %v374
    %v455 = vpop.f32.mrb[0].mxu0
    %v456 = vadd.f32 0.0, %v455
    %v457 = vpop.f32.mrb[0].mxu0
    %458 = vmatprep.mubr.f32.mxu0 0.0
    %459 = vmatmul.mubr.f32.gmra.mrb[0].mxu0 %v377
    %v460 = vpop.f32.mrb[0].mxu0
    %v461 = vadd.f32 0.0, %v460
    %v462 = vpop.f32.mrb[0].mxu0
    %463 = vdwg.mxu0
    %v464 = vld [vmem:[#allocation2] sm:$0xff]
    %v465 = vld [vmem:[#allocation2 + $0x8] sm:$0xff]
    %v466 = vld [vmem:[#allocation2 + $0x10] sm:$0xff]
    %v467 = vld [vmem:[#allocation2 + $0x18] sm:$0xff]
    %v468 = vld [vmem:[#allocation2 + $0x20] sm:$0xff]
    %v469 = vld [vmem:[#allocation2 + $0x28] sm:$0xff]
    %v470 = vld [vmem:[#allocation2 + $0x30] sm:$0xff]
    %v471 = vld [vmem:[#allocation2 + $0x38] sm:$0xff]
    %v472 = vmul.f32 %v464, 0.9999999
    %v473 = vmul.f32 %v465, 0.9999999
    %v474 = vmul.f32 %v466, 0.9999999
    %v475 = vmul.f32 %v467, 0.9999999
    %v476 = vmul.f32 %v468, 0.9999999
    %v477 = vmul.f32 %v469, 0.9999999
    %v478 = vmul.f32 %v470, 0.9999999
    %v479 = vmul.f32 %v471, 0.9999999
    %v480 = vadd.f32 %v472, %v317
    %v481 = vadd.f32 %v473, %v322
    %v482 = vadd.f32 %v474, %v327
    %v483 = vadd.f32 %v475, %v332
    %v484 = vadd.f32 %v476, %v446
    %v485 = vadd.f32 %v477, %v451
    %v486 = vadd.f32 %v478, %v456
    %v487 = vadd.f32 %v479, %v461
    %v488 = vld [vmem:[#allocation5] sm:$0xff]
    %v489 = vld [vmem:[#allocation5 + $0x8] sm:$0xff]
    %v490 = vld [vmem:[#allocation5 + $0x10] sm:$0xff]
    %v491 = vld [vmem:[#allocation5 + $0x18] sm:$0xff]
    %v492 = vld [vmem:[#allocation5 + $0x20] sm:$0xff]
    %v493 = vld [vmem:[#allocation5 + $0x28] sm:$0xff]
    %v494 = vld [vmem:[#allocation5 + $0x30] sm:$0xff]
    %v495 = vld [vmem:[#allocation5 + $0x38] sm:$0xff]
    %v496 = vmul.f32 %v488, 0.9999999
    %v497 = vmul.f32 %v489, 0.9999999
    %v498 = vmul.f32 %v490, 0.9999999
    %v499 = vmul.f32 %v491, 0.9999999
    %v500 = vmul.f32 %v492, 0.9999999
    %v501 = vmul.f32 %v493, 0.9999999
    %v502 = vmul.f32 %v494, 0.9999999
    %v503 = vmul.f32 %v495, 0.9999999
    %v504 = vadd.f32 %v496, %v189
    %v505 = vadd.f32 %v497, %v190
    %v506 = vadd.f32 %v498, %v191
    %v507 = vadd.f32 %v499, %v192
    %v508 = vadd.f32 %v500, %v193
    %v509 = vadd.f32 %v501, %v194
    %v510 = vadd.f32 %v502, %v195
    %v511 = vadd.f32 %v503, %v196
    %v513 = vsel %vm237, %v117, 0
    %v516 = vsel %vm237, %v118, 0
    %v519 = vsel %vm237, %v119, 0
    %v522 = vsel %vm237, %v120, 0
    %v525 = vsel %vm237, %v504, 0
    %v528 = vsel %vm237, %v505, 0
    %v531 = vsel %vm237, %v506, 0
    %v534 = vsel %vm237, %v507, 0
    %536 = vmatprep.subr.mxu0 0.0
    %537 = vmatpush1.xpose.msra.mxu0 %v525
    %538 = vmatprep.subr.mxu0 0.0
    %539 = vmatpush1.xpose.msra.mxu0 %v528
    %540 = vmatprep.subr.mxu0 0.0
    %541 = vmatpush1.xpose.msra.mxu0 %v531
    %542 = vmatprep.subr.mxu0 0.0
    %543 = vmatpush1.xpose.msra.mxu0 %v534
    %544 = vmatprep.subr.mxu0 0.0
    %545 = vmatpush1.xpose.msra.mxu0 0.0
    %546 = vmatprep.subr.mxu0 0.0
    %547 = vmatpush1.xpose.msra.mxu0 0.0
    %548 = vmatprep.subr.mxu0 0.0
    %549 = vmatpush1.xpose.msra.mxu0 0.0
    %550 = vmatprep.subr.mxu0 0.0
    %551 = vmatpush1.xpose.msra.mxu0 0.0
    %552 = vmatprep.subr.mxu0 0.0
    %553 = vmatpush1.xpose.msra.mxu0 0.0
    %554 = vmatprep.subr.mxu0 0.0
    %555 = vmatpush1.xpose.msra.mxu0 0.0
    %556 = vmatprep.subr.mxu0 0.0
    %557 = vmatpush1.xpose.msra.mxu0 0.0
    %558 = vmatprep.subr.mxu0 0.0
    %559 = vmatpush1.xpose.msra.mxu0 0.0
    %560 = vmatprep.subr.mxu0 0.0
    %561 = vmatpush1.xpose.msra.mxu0 0.0
    %562 = vmatprep.subr.mxu0 0.0
    %563 = vmatpush1.xpose.msra.mxu0 0.0
    %564 = vmatprep.subr.mxu0 0.0
    %565 = vmatpush1.xpose.msra.mxu0 0.0
    %566 = vmatprep.subr.mxu0 0.0
    %567 = vmatpush1.xpose.msra.mxu0 0.0
    %568 = vmatprep.subr.mxu0 0.0
    %569 = vmatpush1.xpose.msra.mxu0 0.0
    %570 = vmatprep.subr.mxu0 0.0
    %571 = vmatpush1.xpose.msra.mxu0 0.0
    %572 = vmatprep.subr.mxu0 0.0
    %573 = vmatpush1.xpose.msra.mxu0 0.0
    %574 = vmatprep.subr.mxu0 0.0
    %575 = vmatpush1.xpose.msra.mxu0 0.0
    %576 = vmatprep.subr.mxu0 0.0
    %577 = vmatpush1.xpose.msra.mxu0 0.0
    %578 = vmatprep.subr.mxu0 0.0
    %579 = vmatpush1.xpose.msra.mxu0 0.0
    %580 = vmatprep.subr.mxu0 0.0
    %581 = vmatpush1.xpose.msra.mxu0 0.0
    %582 = vmatprep.subr.mxu0 0.0
    %583 = vmatpush1.xpose.msra.mxu0 0.0
    %584 = vmatprep.subr.mxu0 0.0
    %585 = vmatpush1.xpose.msra.mxu0 0.0
    %586 = vmatprep.subr.mxu0 0.0
    %587 = vmatpush1.xpose.msra.mxu0 0.0
    %588 = vmatprep.subr.mxu0 0.0
    %589 = vmatpush1.xpose.msra.mxu0 0.0
    %590 = vmatprep.subr.mxu0 0.0
    %591 = vmatpush1.xpose.msra.mxu0 0.0
    %592 = vmatprep.subr.mxu0 0.0
    %593 = vmatpush1.xpose.msra.mxu0 0.0
    %594 = vmatprep.subr.mxu0 0.0
    %595 = vmatpush1.xpose.msra.mxu0 0.0
    %596 = vmatprep.subr.mxu0 0.0
    %597 = vmatpush1.xpose.msra.mxu0 0.0
    %598 = vmatprep.subr.mxu0 0.0
    %599 = vmatpush1.xpose.msra.mxu0 0.0
    %600 = vmatprep.mubr.f32.mxu0 0.0
    %601 = vmatmul.mubr.f32.gmra.mrb[0].mxu0 %v513
    %v602 = vpop.f32.mrb[0].mxu0
    %v603 = vadd.f32 1e-08, %v602
    %v604 = vpop.f32.mrb[0].mxu0
    %605 = vmatprep.mubr.f32.mxu0 0.0
    %606 = vmatmul.mubr.f32.gmra.mrb[0].mxu0 %v516
    %v607 = vpop.f32.mrb[0].mxu0
    %v608 = vadd.f32 1e-08, %v607
    %v609 = vpop.f32.mrb[0].mxu0
    %610 = vmatprep.mubr.f32.mxu0 0.0
    %611 = vmatmul.mubr.f32.gmra.mrb[0].mxu0 %v519
    %v612 = vpop.f32.mrb[0].mxu0
    %v613 = vadd.f32 1e-08, %v612
    %v614 = vpop.f32.mrb[0].mxu0
    %615 = vmatprep.mubr.f32.mxu0 0.0
    %616 = vmatmul.mubr.f32.gmra.mrb[0].mxu0 %v522
    %v617 = vpop.f32.mrb[0].mxu0
    %v618 = vadd.f32 1e-08, %v617
    %v619 = vpop.f32.mrb[0].mxu0
    %620 = vdwg.mxu0
    %v622 = vsel %vm237, %v121, 0
    %v625 = vsel %vm237, %v122, 0
    %v628 = vsel %vm237, %v123, 0
    %v631 = vsel %vm237, %v124, 0
    %v634 = vsel %vm237, %v508, 0
    %v637 = vsel %vm237, %v509, 0
    %v640 = vsel %vm237, %v510, 0
    %v643 = vsel %vm237, %v511, 0
    %645 = vmatprep.subr.mxu0 0.0
    %646 = vmatpush1.xpose.msra.mxu0 %v634
    %647 = vmatprep.subr.mxu0 0.0
    %648 = vmatpush1.xpose.msra.mxu0 %v637
    %649 = vmatprep.subr.mxu0 0.0
    %650 = vmatpush1.xpose.msra.mxu0 %v640
    %651 = vmatprep.subr.mxu0 0.0
    %652 = vmatpush1.xpose.msra.mxu0 %v643
    %653 = vmatprep.subr.mxu0 0.0
    %654 = vmatpush1.xpose.msra.mxu0 0.0
    %655 = vmatprep.subr.mxu0 0.0
    %656 = vmatpush1.xpose.msra.mxu0 0.0
    %657 = vmatprep.subr.mxu0 0.0
    %658 = vmatpush1.xpose.msra.mxu0 0.0
    %659 = vmatprep.subr.mxu0 0.0
    %660 = vmatpush1.xpose.msra.mxu0 0.0
    %661 = vmatprep.subr.mxu0 0.0
    %662 = vmatpush1.xpose.msra.mxu0 0.0
    %663 = vmatprep.subr.mxu0 0.0
    %664 = vmatpush1.xpose.msra.mxu0 0.0
    %665 = vmatprep.subr.mxu0 0.0
    %666 = vmatpush1.xpose.msra.mxu0 0.0
    %667 = vmatprep.subr.mxu0 0.0
    %668 = vmatpush1.xpose.msra.mxu0 0.0
    %669 = vmatprep.subr.mxu0 0.0
    %670 = vmatpush1.xpose.msra.mxu0 0.0
    %671 = vmatprep.subr.mxu0 0.0
    %672 = vmatpush1.xpose.msra.mxu0 0.0
    %673 = vmatprep.subr.mxu0 0.0
    %674 = vmatpush1.xpose.msra.mxu0 0.0
    %675 = vmatprep.subr.mxu0 0.0
    %676 = vmatpush1.xpose.msra.mxu0 0.0
    %677 = vmatprep.subr.mxu0 0.0
    %678 = vmatpush1.xpose.msra.mxu0 0.0
    %679 = vmatprep.subr.mxu0 0.0
    %680 = vmatpush1.xpose.msra.mxu0 0.0
    %681 = vmatprep.subr.mxu0 0.0
    %682 = vmatpush1.xpose.msra.mxu0 0.0
    %683 = vmatprep.subr.mxu0 0.0
    %684 = vmatpush1.xpose.msra.mxu0 0.0
    %685 = vmatprep.subr.mxu0 0.0
    %686 = vmatpush1.xpose.msra.mxu0 0.0
    %687 = vmatprep.subr.mxu0 0.0
    %688 = vmatpush1.xpose.msra.mxu0 0.0
    %689 = vmatprep.subr.mxu0 0.0
    %690 = vmatpush1.xpose.msra.mxu0 0.0
    %691 = vmatprep.subr.mxu0 0.0
    %692 = vmatpush1.xpose.msra.mxu0 0.0
    %693 = vmatprep.subr.mxu0 0.0
    %694 = vmatpush1.xpose.msra.mxu0 0.0
    %695 = vmatprep.subr.mxu0 0.0
    %696 = vmatpush1.xpose.msra.mxu0 0.0
    %697 = vmatprep.subr.mxu0 0.0
    %698 = vmatpush1.xpose.msra.mxu0 0.0
    %699 = vmatprep.subr.mxu0 0.0
    %700 = vmatpush1.xpose.msra.mxu0 0.0
    %701 = vmatprep.subr.mxu0 0.0
    %702 = vmatpush1.xpose.msra.mxu0 0.0
    %703 = vmatprep.subr.mxu0 0.0
    %704 = vmatpush1.xpose.msra.mxu0 0.0
    %705 = vmatprep.subr.mxu0 0.0
    %706 = vmatpush1.xpose.msra.mxu0 0.0
    %707 = vmatprep.subr.mxu0 0.0
    %708 = vmatpush1.xpose.msra.mxu0 0.0
    %709 = vmatprep.mubr.f32.mxu0 0.0
    %710 = vmatmul.mubr.f32.gmra.mrb[0].mxu0 %v622
    %v711 = vpop.f32.mrb[0].mxu0
    %v712 = vadd.f32 1e-08, %v711
    %v713 = vpop.f32.mrb[0].mxu0
    %714 = vmatprep.mubr.f32.mxu0 0.0
    %715 = vmatmul.mubr.f32.gmra.mrb[0].mxu0 %v625
    %v716 = vpop.f32.mrb[0].mxu0
    %v717 = vadd.f32 1e-08, %v716
    %v718 = vpop.f32.mrb[0].mxu0
    %719 = vmatprep.mubr.f32.mxu0 0.0
    %720 = vmatmul.mubr.f32.gmra.mrb[0].mxu0 %v628
    %v721 = vpop.f32.mrb[0].mxu0
    %v722 = vadd.f32 1e-08, %v721
    %v723 = vpop.f32.mrb[0].mxu0
    %724 = vmatprep.mubr.f32.mxu0 0.0
    %725 = vmatmul.mubr.f32.gmra.mrb[0].mxu0 %v631
    %v726 = vpop.f32.mrb[0].mxu0
    %v727 = vadd.f32 1e-08, %v726
    %v728 = vpop.f32.mrb[0].mxu0
    %729 = vdwg.mxu0
    %730 = vmatprep.subr.mxu0 0.0
    %731 = vmatpush1.msra.mxu0 %v480
    %732 = vmatprep.subr.mxu0 0.0
    %733 = vmatpush1.msra.mxu0 %v481
    %734 = vmatprep.subr.mxu0 0.0
    %735 = vmatpush1.msra.mxu0 %v482
    %736 = vmatprep.subr.mxu0 0.0
    %737 = vmatpush1.msra.mxu0 %v483
    %738 = vmatprep.subr.mxu0 0.0
    %739 = vmatpush1.msra.mxu0 0.0
    %740 = vmatprep.subr.mxu0 0.0
    %741 = vmatpush1.msra.mxu0 0.0
    %742 = vmatprep.subr.mxu0 0.0
    %743 = vmatpush1.msra.mxu0 0.0
    %744 = vmatprep.subr.mxu0 0.0
    %745 = vmatpush1.msra.mxu0 0.0
    %746 = vmatprep.subr.mxu0 0.0
    %747 = vmatpush1.msra.mxu0 0.0
    %748 = vmatprep.subr.mxu0 0.0
    %749 = vmatpush1.msra.mxu0 0.0
    %750 = vmatprep.subr.mxu0 0.0
    %751 = vmatpush1.msra.mxu0 0.0
    %752 = vmatprep.subr.mxu0 0.0
    %753 = vmatpush1.msra.mxu0 0.0
    %754 = vmatprep.subr.mxu0 0.0
    %755 = vmatpush1.msra.mxu0 0.0
    %756 = vmatprep.subr.mxu0 0.0
    %757 = vmatpush1.msra.mxu0 0.0
    %758 = vmatprep.subr.mxu0 0.0
    %759 = vmatpush1.msra.mxu0 0.0
    %760 = vmatprep.subr.mxu0 0.0
    %761 = vmatpush1.msra.mxu0 0.0
    %762 = vmatprep.subr.mxu0 0.0
    %763 = vmatpush1.msra.mxu0 0.0
    %764 = vmatprep.subr.mxu0 0.0
    %765 = vmatpush1.msra.mxu0 0.0
    %766 = vmatprep.subr.mxu0 0.0
    %767 = vmatpush1.msra.mxu0 0.0
    %768 = vmatprep.subr.mxu0 0.0
    %769 = vmatpush1.msra.mxu0 0.0
    %770 = vmatprep.subr.mxu0 0.0
    %771 = vmatpush1.msra.mxu0 0.0
    %772 = vmatprep.subr.mxu0 0.0
    %773 = vmatpush1.msra.mxu0 0.0
    %774 = vmatprep.subr.mxu0 0.0
    %775 = vmatpush1.msra.mxu0 0.0
    %776 = vmatprep.subr.mxu0 0.0
    %777 = vmatpush1.msra.mxu0 0.0
    %778 = vmatprep.subr.mxu0 0.0
    %779 = vmatpush1.msra.mxu0 0.0
    %780 = vmatprep.subr.mxu0 0.0
    %781 = vmatpush1.msra.mxu0 0.0
    %782 = vmatprep.subr.mxu0 0.0
    %783 = vmatpush1.msra.mxu0 0.0
    %784 = vmatprep.subr.mxu0 0.0
    %785 = vmatpush1.msra.mxu0 0.0
    %786 = vmatprep.subr.mxu0 0.0
    %787 = vmatpush1.msra.mxu0 0.0
    %788 = vmatprep.subr.mxu0 0.0
    %789 = vmatpush1.msra.mxu0 0.0
    %790 = vmatprep.subr.mxu0 0.0
    %791 = vmatpush1.msra.mxu0 0.0
    %792 = vmatprep.subr.mxu0 0.0
    %793 = vmatpush1.msra.mxu0 0.0
    %794 = vmatprep.mubr.f32.mxu0 0.0
    %795 = vmatmul.mubr.f32.gmra.mrb[0].mxu0 %v513
    %v796 = vpop.f32.mrb[0].mxu0
    %v797 = vadd.f32 0.0, %v796
    %v798 = vpop.f32.mrb[0].mxu0
    %799 = vmatprep.mubr.f32.mxu0 0.0
    %800 = vmatmul.mubr.f32.gmra.mrb[0].mxu0 %v516
    %v801 = vpop.f32.mrb[0].mxu0
    %v802 = vadd.f32 0.0, %v801
    %v803 = vpop.f32.mrb[0].mxu0
    %804 = vmatprep.mubr.f32.mxu0 0.0
    %805 = vmatmul.mubr.f32.gmra.mrb[0].mxu0 %v519
    %v806 = vpop.f32.mrb[0].mxu0
    %v807 = vadd.f32 0.0, %v806
    %v808 = vpop.f32.mrb[0].mxu0
    %809 = vmatprep.mubr.f32.mxu0 0.0
    %810 = vmatmul.mubr.f32.gmra.mrb[0].mxu0 %v522
    %v811 = vpop.f32.mrb[0].mxu0
    %v812 = vadd.f32 0.0, %v811
    %v813 = vpop.f32.mrb[0].mxu0
    %814 = vdwg.mxu0
    %815 = vmatprep.subr.mxu0 0.0
    %816 = vmatpush1.msra.mxu0 %v484
    %817 = vmatprep.subr.mxu0 0.0
    %818 = vmatpush1.msra.mxu0 %v485
    %819 = vmatprep.subr.mxu0 0.0
    %820 = vmatpush1.msra.mxu0 %v486
    %821 = vmatprep.subr.mxu0 0.0
    %822 = vmatpush1.msra.mxu0 %v487
    %823 = vmatprep.subr.mxu0 0.0
    %824 = vmatpush1.msra.mxu0 0.0
    %825 = vmatprep.subr.mxu0 0.0
    %826 = vmatpush1.msra.mxu0 0.0
    %827 = vmatprep.subr.mxu0 0.0
    %828 = vmatpush1.msra.mxu0 0.0
    %829 = vmatprep.subr.mxu0 0.0
    %830 = vmatpush1.msra.mxu0 0.0
    %831 = vmatprep.subr.mxu0 0.0
    %832 = vmatpush1.msra.mxu0 0.0
    %833 = vmatprep.subr.mxu0 0.0
    %834 = vmatpush1.msra.mxu0 0.0
    %835 = vmatprep.subr.mxu0 0.0
    %836 = vmatpush1.msra.mxu0 0.0
    %837 = vmatprep.subr.mxu0 0.0
    %838 = vmatpush1.msra.mxu0 0.0
    %839 = vmatprep.subr.mxu0 0.0
    %840 = vmatpush1.msra.mxu0 0.0
    %841 = vmatprep.subr.mxu0 0.0
    %842 = vmatpush1.msra.mxu0 0.0
    %843 = vmatprep.subr.mxu0 0.0
    %844 = vmatpush1.msra.mxu0 0.0
    %845 = vmatprep.subr.mxu0 0.0
    %846 = vmatpush1.msra.mxu0 0.0
    %847 = vmatprep.subr.mxu0 0.0
    %848 = vmatpush1.msra.mxu0 0.0
    %849 = vmatprep.subr.mxu0 0.0
    %850 = vmatpush1.msra.mxu0 0.0
    %851 = vmatprep.subr.mxu0 0.0
    %852 = vmatpush1.msra.mxu0 0.0
    %853 = vmatprep.subr.mxu0 0.0
    %854 = vmatpush1.msra.mxu0 0.0
    %855 = vmatprep.subr.mxu0 0.0
    %856 = vmatpush1.msra.mxu0 0.0
    %857 = vmatprep.subr.mxu0 0.0
    %858 = vmatpush1.msra.mxu0 0.0
    %859 = vmatprep.subr.mxu0 0.0
    %860 = vmatpush1.msra.mxu0 0.0
    %861 = vmatprep.subr.mxu0 0.0
    %862 = vmatpush1.msra.mxu0 0.0
    %863 = vmatprep.subr.mxu0 0.0
    %864 = vmatpush1.msra.mxu0 0.0
    %865 = vmatprep.subr.mxu0 0.0
    %866 = vmatpush1.msra.mxu0 0.0
    %867 = vmatprep.subr.mxu0 0.0
    %868 = vmatpush1.msra.mxu0 0.0
    %869 = vmatprep.subr.mxu0 0.0
    %870 = vmatpush1.msra.mxu0 0.0
    %871 = vmatprep.subr.mxu0 0.0
    %872 = vmatpush1.msra.mxu0 0.0
    %873 = vmatprep.subr.mxu0 0.0
    %874 = vmatpush1.msra.mxu0 0.0
    %875 = vmatprep.subr.mxu0 0.0
    %876 = vmatpush1.msra.mxu0 0.0
    %877 = vmatprep.subr.mxu0 0.0
    %878 = vmatpush1.msra.mxu0 0.0
    %879 = vmatprep.mubr.f32.mxu0 0.0
    %880 = vmatmul.mubr.f32.gmra.mrb[0].mxu0 %v622
    %v881 = vpop.f32.mrb[0].mxu0
    %v882 = vadd.f32 0.0, %v881
    %v883 = vpop.f32.mrb[0].mxu0
    %884 = vmatprep.mubr.f32.mxu0 0.0
    %885 = vmatmul.mubr.f32.gmra.mrb[0].mxu0 %v625
    %v886 = vpop.f32.mrb[0].mxu0
    %v887 = vadd.f32 0.0, %v886
    %v888 = vpop.f32.mrb[0].mxu0
    %889 = vmatprep.mubr.f32.mxu0 0.0
    %890 = vmatmul.mubr.f32.gmra.mrb[0].mxu0 %v628
    %v891 = vpop.f32.mrb[0].mxu0
    %v892 = vadd.f32 0.0, %v891
    %v893 = vpop.f32.mrb[0].mxu0
    %894 = vmatprep.mubr.f32.mxu0 0.0
    %895 = vmatmul.mubr.f32.gmra.mrb[0].mxu0 %v631
    %v896 = vpop.f32.mrb[0].mxu0
    %v897 = vadd.f32 0.0, %v896
    %v898 = vpop.f32.mrb[0].mxu0
    %899 = vdwg.mxu0
    %v900 = vrcp.pop %v603
    %v901 = vrcp.pop %v608
    %v902 = vrcp.pop %v613
    %v903 = vrcp.pop %v618
    %v904 = vrcp.pop %v712
    %v905 = vrcp.pop %v717
    %v906 = vrcp.pop %v722
    %v907 = vrcp.pop %v727
    %v908 = vmul.f32 %v797, %v900
    %v909 = vmul.f32 %v802, %v901
    %v910 = vmul.f32 %v807, %v902
    %v911 = vmul.f32 %v812, %v903
    %v912 = vmul.f32 %v882, %v904
    %v913 = vmul.f32 %v887, %v905
    %v914 = vmul.f32 %v892, %v906
    %v915 = vmul.f32 %v897, %v907
    %916 = vst.msk [vmem:[#allocation7] sm:$0xff] %vm237, %v908
    %917 = vst.msk [vmem:[#allocation7 + $0x8] sm:$0xff] %vm237, %v909
    %918 = vst.msk [vmem:[#allocation7 + $0x10] sm:$0xff] %vm237, %v910
    %919 = vst.msk [vmem:[#allocation7 + $0x18] sm:$0xff] %vm237, %v911
    %920 = vst.msk [vmem:[#allocation7 + $0x20] sm:$0xff] %vm237, %v912
    %921 = vst.msk [vmem:[#allocation7 + $0x28] sm:$0xff] %vm237, %v913
    %922 = vst.msk [vmem:[#allocation7 + $0x30] sm:$0xff] %vm237, %v914
    %923 = vst.msk [vmem:[#allocation7 + $0x38] sm:$0xff] %vm237, %v915
    %924 = vst.msk [vmem:[#allocation8] sm:$0xff] %vm237, %v480
    %925 = vst.msk [vmem:[#allocation8 + $0x8] sm:$0xff] %vm237, %v481
    %926 = vst.msk [vmem:[#allocation8 + $0x10] sm:$0xff] %vm237, %v482
    %927 = vst.msk [vmem:[#allocation8 + $0x18] sm:$0xff] %vm237, %v483
    %928 = vst.msk [vmem:[#allocation8 + $0x20] sm:$0xff] %vm237, %v484
    %929 = vst.msk [vmem:[#allocation8 + $0x28] sm:$0xff] %vm237, %v485
    %930 = vst.msk [vmem:[#allocation8 + $0x30] sm:$0xff] %vm237, %v486
    %931 = vst.msk [vmem:[#allocation8 + $0x38] sm:$0xff] %vm237, %v487
    %932 = vst.msk [vmem:[#allocation10] sm:$0xff] %vm237, %v504
    %933 = vst.msk [vmem:[#allocation10 + $0x8] sm:$0xff] %vm237, %v505
    %934 = vst.msk [vmem:[#allocation10 + $0x10] sm:$0xff] %vm237, %v506
    %935 = vst.msk [vmem:[#allocation10 + $0x18] sm:$0xff] %vm237, %v507
    %936 = vst.msk [vmem:[#allocation10 + $0x20] sm:$0xff] %vm237, %v508
    %937 = vst.msk [vmem:[#allocation10 + $0x28] sm:$0xff] %vm237, %v509
    %938 = vst.msk [vmem:[#allocation10 + $0x30] sm:$0xff] %vm237, %v510
    %939 = vst.msk [vmem:[#allocation10 + $0x38] sm:$0xff] %vm237, %v511
    // Predicated region
    $region30: #{tpu_custom_call.1} parent=1 // pred_check
      _
    $region31: #{tpu_custom_call.1} parent=1 // pred_check_branch
      %941 = sbr.rel (0) target = $region33
    $region32: #{tpu_custom_call.1} parent=1 // pred_region
      %s943 = ssub.s32 1024, 1024
      %944 = vsyncadd [#allocation4], %s943
      %s945 = sshll.u32 [#allocation7], 4
      %s946 = int_to_ptr.vmem [resolvable:$true] %s945
      %951 = dma.vmem_to_hbm [thread:$0]  %s946, 1024, %s5, [#allocation4], 128, 128, 8
    $region33: #{tpu_custom_call.1} parent=1 // pred_fallthru
      _
    // Predicated region
    $region34: #{tpu_custom_call.1} parent=1 // pred_check
      _
    $region35: #{tpu_custom_call.1} parent=1 // pred_check_branch
      %953 = sbr.rel (0) target = $region37
    $region36: #{tpu_custom_call.1} parent=1 // pred_region
      %s955 = ssub.s32 1024, 1024
      %956 = vsyncadd [#allocation9], %s955
      %s957 = sshll.u32 [#allocation8], 4
      %s958 = int_to_ptr.vmem [resolvable:$true] %s957
      %963 = dma.vmem_to_hbm [thread:$0]  %s958, 1024, %s6, [#allocation9], 128, 128, 8
    $region37: #{tpu_custom_call.1} parent=1 // pred_fallthru
      _
    // Predicated region
    $region38: #{tpu_custom_call.1} parent=1 // pred_check
      _
    $region39: #{tpu_custom_call.1} parent=1 // pred_check_branch
      %965 = sbr.rel (0) target = $region41
    $region40: #{tpu_custom_call.1} parent=1 // pred_region
      %s967 = ssub.s32 1024, 1024
      %968 = vsyncadd [#allocation9], %s967
      %s969 = sshll.u32 [#allocation10], 4
      %s970 = int_to_ptr.vmem [resolvable:$true] %s969
      %975 = dma.vmem_to_hbm [thread:$0]  %s970, 1024, %s7, [#allocation9], 128, 128, 8
    $region41: #{tpu_custom_call.1} parent=1 // pred_fallthru
      _
    // Predicated region
    $region42: #{tpu_custom_call.1} parent=1 // pred_check
      _
    $region43: #{tpu_custom_call.1} parent=1 // pred_check_branch
      %977 = sbr.rel (0) target = $region45
    $region44: #{tpu_custom_call.1} parent=1 // pred_region
      %978 = dma.done [#allocation4], 1024
    $region45: #{tpu_custom_call.1} parent=1 // pred_fallthru
      _
    // Predicated region
    $region46: #{tpu_custom_call.1} parent=1 // pred_check
      _
    $region47: #{tpu_custom_call.1} parent=1 // pred_check_branch
      %980 = sbr.rel (0) target = $region49
    $region48: #{tpu_custom_call.1} parent=1 // pred_region
      %981 = dma.done [#allocation9], 1024
    $region49: #{tpu_custom_call.1} parent=1 // pred_fallthru
      _
    // Predicated region
    $region50: #{tpu_custom_call.1} parent=1 // pred_check
      _
    $region51: #{tpu_custom_call.1} parent=1 // pred_check_branch
      %983 = sbr.rel (0) target = $region53
    $region52: #{tpu_custom_call.1} parent=1 // pred_region
      %984 = dma.done [#allocation9], 1024
    $region53: #{tpu_custom_call.1} parent=1 // pred_fallthru
      _
    %985 = vsyncpa [#allocation3], 1
    %986 = vsyncpa [#allocation6], 1
    %987 = vsyncpa [#allocation4], 1
    %988 = vsyncpa [#allocation9], 1

</llo_original>
